<compile_context>
chip_gen: v7x
topology: tpu7x:2x2x1
jax: 0.10.0
libtpu: 0.0.40
codegen_flags: <defaults>
</compile_context>

<pallas_src>
import jax
import jax.numpy as jnp
from jax.experimental import pallas as pl
from jax.experimental.pallas import tpu as pltpu


# --------------------------------------------------------------------------- #
# Kernel
# --------------------------------------------------------------------------- #
def _loss_combiner_kernel(w_ref, l1_ref, l2_ref, o_ref):
    # w_ref lives in SMEM: [w0, w1, b].  Read each scalar exactly once per step.
    w0 = w_ref[0]
    w1 = w_ref[1]
    b = w_ref[2]
    # Compute in f32 regardless of I/O dtype (v5e VPU has no native bf16).
    x = l1_ref[...].astype(jnp.float32) * w0 + (l2_ref[...].astype(jnp.float32) * w1 + b)
    # Stable softplus: max(x, 0) + log1p(exp(-|x|))  (exp/log1p -> EUP slot).
    sp = jnp.maximum(x, 0.0) + jnp.log1p(jnp.exp(-jnp.abs(x)))
    o_ref[...] = sp.astype(o_ref.dtype)


# --------------------------------------------------------------------------- #
# Helpers
# --------------------------------------------------------------------------- #
def _softplus_affine_xla(l1, l2, w0, w1, b, out_dtype):
    """Plain fused XLA path for tiny inputs (no kernel launch)."""
    x = l1.astype(jnp.float32) * w0 + (l2.astype(jnp.float32) * w1 + b)
    return (jnp.maximum(x, 0.0) + jnp.log1p(jnp.exp(-jnp.abs(x)))).astype(out_dtype)


def _vmem_budget():
    """(max_block_bytes_per_array, vmem_limit_bytes), generation-aware."""
    cap = 64 << 20  # conservative default (v7x per-TC VMEM)
    try:
        info = pltpu.get_tpu_info()
        c = getattr(info, "vmem_capacity_bytes", None)
        if c:
            cap = int(c)
    except Exception:
        pass
    if cap <= (96 << 20):
        # v7x-like: 64 MiB VMEM/TC.  3 streams x 2 bufs x 4 MiB = 24 MiB used.
        return 4 << 20, 48 << 20
    # v5e/v6e: 128 MiB VMEM.  3 streams x 2 bufs x 12 MiB = 72 MiB used.
    return 12 << 20, 96 << 20


def _pick_lanes(t_pad, lanes_max):
    """Largest multiple of 128 that divides t_pad and is <= lanes_max."""
    m = t_pad // 128
    for k in range(min(lanes_max // 128, m), 0, -1):
        if m % k == 0:
            return 128 * k
    return 128


# --------------------------------------------------------------------------- #
# Wrapper
# --------------------------------------------------------------------------- #
def loss_combiner(l1, l2, weight, bias, *, out_dtype=None, lanes_max=4096,
                  small_threshold=65536, force_pallas=False):
    """softplus(w0*l1 + w1*l2 + b), elementwise over arbitrary-shaped l1/l2.

    l1, l2: same shape/dtype (any rank). weight: (1, 2), bias: (1,) — the
    nn.Linear(2, 1) parameters.  out_dtype optionally narrows the stored result
    (compute is always f32).
    """
    assert l1.shape == l2.shape, "l1 and l2 must have the same shape"
    assert l1.dtype == l2.dtype, "l1 and l2 must have the same dtype"
    orig_shape = l1.shape
    in_dtype = l1.dtype
    out_dtype = in_dtype if out_dtype is None else jnp.dtype(out_dtype)
    T = int(l1.size)

    w_flat = weight.reshape(-1).astype(jnp.float32)
    b_flat = bias.reshape(-1).astype(jnp.float32)

    # Tiny inputs: fused XLA elementwise beats any pallas_call launch floor.
    if T == 0 or (T < small_threshold and not force_pallas):
        return _softplus_affine_xla(l1, l2, w_flat[0], w_flat[1], b_flat[0], out_dtype)

    w_smem = jnp.concatenate([w_flat, b_flat])  # (3,) = [w0, w1, b]

    # ---- lane-dense 2-D layout, avoiding padded copies whenever possible ----
    l1f = l1.reshape(-1)
    l2f = l2.reshape(-1)
    pad = (-T) % 128                 # only a true sub-lane remainder forces a pad
    t_pad = T + pad
    if pad:
        l1f = jnp.pad(l1f, (0, pad))
        l2f = jnp.pad(l2f, (0, pad))
    lanes = _pick_lanes(t_pad, lanes_max)
    rows = t_pad // lanes            # exact: reshape is a pure metadata op
    l1_2d = l1f.reshape(rows, lanes)
    l2_2d = l2f.reshape(rows, lanes)

    # ---- generation-aware block sizing ----
    max_block_bytes, vmem_limit = _vmem_budget()
    bytes_per_row = lanes * jnp.dtype(in_dtype).itemsize
    if rows <= 8:
        tile_r = rows                # full-extent block (allowed even if rows % 8 != 0)
    else:
        tile_r = max(8, (max_block_bytes // bytes_per_row) // 8 * 8)
        # Cap so the grid has >= 2 steps: lets the "parallel" axis shard across
        # both TensorCores on v7x instead of one monolithic block.
        half = ((-(-rows // 2)) + 7) // 8 * 8
        tile_r = min(tile_r, half)

    grid = (pl.cdiv(rows, tile_r),)  # final partial block is masked by Pallas

    out_2d = pl.pallas_call(
        _loss_combiner_kernel,
        out_shape=jax.ShapeDtypeStruct((rows, lanes), out_dtype),
        grid=grid,
        in_specs=[
            pl.BlockSpec(memory_space=pltpu.MemorySpace.SMEM),   # [w0, w1, b]
            pl.BlockSpec((tile_r, lanes), lambda i: (i, 0)),     # l1
            pl.BlockSpec((tile_r, lanes), lambda i: (i, 0)),     # l2
        ],
        out_specs=pl.BlockSpec((tile_r, lanes), lambda i: (i, 0)),
        compiler_params=pltpu.CompilerParams(
            dimension_semantics=("parallel",),
            vmem_limit_bytes=vmem_limit,
        ),
    )(w_smem, l1_2d, l2_2d)

    if pad:
        return out_2d.reshape(-1)[:T].reshape(orig_shape)
    return out_2d.reshape(orig_shape)


# --------------------------------------------------------------------------- #
# Pure-JAX reference (mirrors the PyTorch module)
# --------------------------------------------------------------------------- #
def loss_combiner_ref(l1, l2, weight, bias):
    x = jnp.stack([l1, l2], axis=-1)                       # (..., 2)
    combined = jnp.squeeze(x @ weight.T + bias, axis=-1)   # (...,)
    return jax.nn.softplus(combined)


if __name__ == "__main__":
    key = jax.random.PRNGKey(0)
    k1, k2, k3, k4, k5, k6, k7, k8, kw, kb = jax.random.split(key, 10)

    # Deterministic nn.Linear(2, 1) parameter init (synthetic, no checkpoint).
    weight = jax.random.uniform(kw, (1, 2), dtype=jnp.float32, minval=-0.5, maxval=0.5)
    bias = jax.random.uniform(kb, (1,), dtype=jnp.float32, minval=-0.5, maxval=0.5)

    # Case 1: vreg-aligned small shape -> pallas kernel, no padding, 1 block.
    B, N = 8, 128
    l1 = jax.random.normal(k1, (B, N), dtype=jnp.float32)
    l2 = jax.random.normal(k2, (B, N), dtype=jnp.float32)
    out = jax.block_until_ready(loss_combiner(l1, l2, weight, bias, force_pallas=True))
    expected = loss_combiner_ref(l1, l2, weight, bias)
    assert out.shape == (B, N)
    assert jnp.allclose(out, expected, atol=1e-5, rtol=1e-5), "mismatch (aligned case)"

    # Case 2: rows > 8, lane-dense, multi-step grid with a masked edge block.
    l1c = jax.random.normal(k3, (131, 128), dtype=jnp.float32)
    l2c = jax.random.normal(k4, (131, 128), dtype=jnp.float32)
    outc = jax.block_until_ready(loss_combiner(l1c, l2c, weight, bias, force_pallas=True))
    expectedc = loss_combiner_ref(l1c, l2c, weight, bias)
    assert outc.shape == (131, 128)
    assert jnp.allclose(outc, expectedc, atol=1e-5, rtol=1e-5), "mismatch (edge-block case)"

    # Case 3: ragged tiny shape -> XLA short-circuit path (no kernel launch).
    l1b = jax.random.normal(k5, (5, 37), dtype=jnp.float32)
    l2b = jax.random.normal(k6, (5, 37), dtype=jnp.float32)
    outb = jax.block_until_ready(loss_combiner(l1b, l2b, weight, bias))
    expectedb = loss_combiner_ref(l1b, l2b, weight, bias)
    assert outb.shape == (5, 37)
    assert jnp.allclose(outb, expectedb, atol=1e-5, rtol=1e-5), "mismatch (tiny/XLA case)"

    # Case 4: ragged shape forced through the kernel -> minimal (<128 elem) pad path.
    l1d = jax.random.normal(k7, (6, 40), dtype=jnp.float32)
    l2d = jax.random.normal(k8, (6, 40), dtype=jnp.float32)
    outd = jax.block_until_ready(loss_combiner(l1d, l2d, weight, bias, force_pallas=True))
    expectedd = loss_combiner_ref(l1d, l2d, weight, bias)
    assert outd.shape == (6, 40)
    assert jnp.allclose(outd, expectedd, atol=1e-5, rtol=1e-5), "mismatch (ragged kernel case)"

    # Case 5: narrowed output dtype (store traffic saver); compute stays f32.
    out_bf16 = jax.block_until_ready(
        loss_combiner(l1, l2, weight, bias, out_dtype=jnp.bfloat16, force_pallas=True))
    assert out_bf16.dtype == jnp.bfloat16
    assert jnp.allclose(out_bf16.astype(jnp.float32), expected, atol=2e-2, rtol=2e-2), \
        "mismatch (bf16 output case)"

    print("KERNEL_OK")
</pallas_src>

<mosaic_0001>
module attributes {stable_mosaic.version = 11 : i64} {
  func.func @_loss_combiner_kernel(%arg0: i32, %arg1: memref<3xf32, #tpu.memory_space<smem>>, %arg2: memref<1x1024xf32, #tpu.memory_space<vmem>>, %arg3: memref<1x1024xf32, #tpu.memory_space<vmem>>, %arg4: memref<1x1024xf32, #tpu.memory_space<vmem>>) attributes {dimension_semantics = [#tpu.dimension_semantics<parallel>], iteration_bounds = array<i64: 1>, scalar_prefetch = 0 : i64, scratch_operands = 0 : i64, tpu.core_type = #tpu.core_type<tc>, window_params = [{transform_indices = @transform_0, window_bounds = array<i64: 3>}, {transform_indices = @transform_1, window_bounds = array<i64: 1, 1024>}, {transform_indices = @transform_2, window_bounds = array<i64: 1, 1024>}, {transform_indices = @transform_3, window_bounds = array<i64: 1, 1024>}]} {
    %c0 = arith.constant 0 : index
    %0 = memref.load %arg1[%c0] : memref<3xf32, #tpu.memory_space<smem>>
    %c1 = arith.constant 1 : index
    %1 = memref.load %arg1[%c1] : memref<3xf32, #tpu.memory_space<smem>>
    %c2 = arith.constant 2 : index
    %2 = memref.load %arg1[%c2] : memref<3xf32, #tpu.memory_space<smem>>
    %c0_0 = arith.constant 0 : index
    %c0_1 = arith.constant 0 : index
    %3 = vector.load %arg2[%c0_0, %c0_1] : memref<1x1024xf32, #tpu.memory_space<vmem>>, vector<1x1024xf32>
    %4 = vector.broadcast %0 : f32 to vector<1x1024xf32>
    %5 = arith.mulf %3, %4 : vector<1x1024xf32>
    %c0_2 = arith.constant 0 : index
    %c0_3 = arith.constant 0 : index
    %6 = vector.load %arg3[%c0_2, %c0_3] : memref<1x1024xf32, #tpu.memory_space<vmem>>, vector<1x1024xf32>
    %7 = vector.broadcast %1 : f32 to vector<1x1024xf32>
    %8 = arith.mulf %6, %7 : vector<1x1024xf32>
    %9 = vector.broadcast %2 : f32 to vector<1x1024xf32>
    %10 = arith.addf %8, %9 : vector<1x1024xf32>
    %11 = arith.addf %5, %10 : vector<1x1024xf32>
    %cst = arith.constant 0.000000e+00 : f32
    %12 = vector.broadcast %cst : f32 to vector<1x1024xf32>
    %13 = arith.maximumf %11, %12 : vector<1x1024xf32>
    %14 = math.absf %11 : vector<1x1024xf32>
    %cst_4 = arith.constant 0.000000e+00 : f32
    %15 = vector.broadcast %cst_4 : f32 to vector<1x1024xf32>
    %16 = arith.subf %15, %14 : vector<1x1024xf32>
    %17 = math.exp %16 : vector<1x1024xf32>
    %18 = math.log1p %17 : vector<1x1024xf32>
    %19 = arith.addf %13, %18 : vector<1x1024xf32>
    %c0_5 = arith.constant 0 : index
    %c0_6 = arith.constant 0 : index
    %20 = vector.load %arg4[%c0_5, %c0_6] : memref<1x1024xf32, #tpu.memory_space<vmem>>, vector<1x1024xf32>
    tpu.vector_store %arg4[%c0_5, %c0_6], %19 {strides = array<i32>} : memref<1x1024xf32, #tpu.memory_space<vmem>>, vector<1x1024xf32>,
    return
  }
  func.func @transform_0(%arg0: i32) -> i32 {
    %c0_i32 = arith.constant 0 : i32
    %c0_i32_0 = arith.constant 0 : i32
    return %c0_i32 : i32
  }
  func.func @transform_1(%arg0: i32) -> (i32, i32) {
    %c0_i32 = arith.constant 0 : i32
    %c0_i32_0 = arith.constant 0 : i32
    return %arg0, %c0_i32 : i32, i32
  }
  func.func @transform_2(%arg0: i32) -> (i32, i32) {
    %c0_i32 = arith.constant 0 : i32
    %c0_i32_0 = arith.constant 0 : i32
    return %arg0, %c0_i32 : i32, i32
  }
  func.func @transform_3(%arg0: i32) -> (i32, i32) {
    %c0_i32 = arith.constant 0 : i32
    %c0_i32_0 = arith.constant 0 : i32
    return %arg0, %c0_i32 : i32, i32
  }
}

</mosaic_0001>

<llo_original>
// kernel: tpu_custom_call.1
$region0: #{tpu_custom_call.1}
  #allocation0 [shape = 'u32[]', space=smem, size = 0x4, offset = 0x4, fixed_abs, tag = 'smem constant byte address 0x4 - core index']
  #allocation1 [shape = 'u32[144,128]{1,0:T(1,128)}', space=vmem, size = 0x12000, scoped, tag = 'internal scratch']
  %s0 = inlined_call_operand.hbm [shape: f32[3], index: 0, kind: input, shape index: {}]
  %s1 = inlined_call_operand.hbm [shape: f32[1,1024], index: 1, kind: input, shape index: {}]
  %s2 = inlined_call_operand.hbm [shape: f32[1,1024], index: 2, kind: input, shape index: {}]
  %s3 = inlined_call_operand.hbm [shape: f32[1,1024], index: 3, kind: output, shape index: {}]
  %s4 = sld [smem:[#allocation0]]
  $region34: #{tpu_custom_call.1} parent=0
    _
  %s6 = ssub.s32 1, %s4
  %s7 = scalar_select 0, %s6, %s4
  $region1: #{tpu_custom_call.1} parent=0
    #allocation2 [shape = 'u8[512]{0}', space=smem, size = 0x200, scoped, tag = 'input window, operand 0, single buffered']
    #allocation3 [shape = 's32[1]{0}', space=sflag, size = 0x4, scoped, tag = 'scoped memory for tpu_custom_call.1']
    #allocation4 [shape = 's32[1]{0}', space=sflag, size = 0x4, scoped, tag = 'scoped memory for tpu_custom_call.1']
    #allocation5 [shape = 's32[1]{0}', space=sflag, size = 0x4, scoped, tag = 'scoped memory for tpu_custom_call.1']
    #allocation6 [shape = 'u8[4096]{0}', space=vmem, size = 0x1000, scoped, tag = 'input window, operand 1, single buffered']
    #allocation7 [shape = 'u8[4096]{0}', space=vmem, size = 0x1000, scoped, tag = 'input window, operand 2, single buffered']
    #allocation8 [shape = 's32[1]{0}', space=sflag, size = 0x4, scoped, tag = 'scoped memory for tpu_custom_call.1']
    #allocation9 [shape = 'u8[4096]{0}', space=vmem, size = 0x1000, scoped, tag = 'output window, operand 0, single buffered']
    %8 = vsyncpa [#allocation5], 0
    %9 = vsyncpa [#allocation3], 0
    %10 = vsyncpa [#allocation8], 0
    %11 = vsyncpa [#allocation4], 0
    // Predicated region
    $region2: #{tpu_custom_call.1} parent=1 // pred_check
      _
    $region3: #{tpu_custom_call.1} parent=1 // pred_check_branch
      %13 = sbr.rel (0) target = $region5
    $region4: #{tpu_custom_call.1} parent=1 // pred_region
      %s15 = ssub.s32 16, 16
      %16 = vsyncadd [#allocation5], %s15
      %19 = dma.hbm_to_smem %s0, 16, [#allocation2], [#allocation5]
    $region5: #{tpu_custom_call.1} parent=1 // pred_fallthru
      _
    // Predicated region
    $region6: #{tpu_custom_call.1} parent=1 // pred_check
      _
    $region7: #{tpu_custom_call.1} parent=1 // pred_check_branch
      %21 = sbr.rel (0) target = $region9
    $region8: #{tpu_custom_call.1} parent=1 // pred_region
      %s23 = ssub.s32 128, 128
      %24 = vsyncadd [#allocation3], %s23
      %s26 = sshll.u32 [#allocation6], 4
      %s27 = int_to_ptr.vmem [resolvable:$true] %s26
      %29 = dma.hbm_to_vmem [thread:$0]  %s1, 128, %s27, [#allocation3]
    $region9: #{tpu_custom_call.1} parent=1 // pred_fallthru
      _
    // Predicated region
    $region10: #{tpu_custom_call.1} parent=1 // pred_check
      _
    $region11: #{tpu_custom_call.1} parent=1 // pred_check_branch
      %31 = sbr.rel (0) target = $region13
    $region12: #{tpu_custom_call.1} parent=1 // pred_region
      %s33 = ssub.s32 128, 128
      %34 = vsyncadd [#allocation8], %s33
      %s36 = sshll.u32 [#allocation7], 4
      %s37 = int_to_ptr.vmem [resolvable:$true] %s36
      %39 = dma.hbm_to_vmem [thread:$0]  %s2, 128, %s37, [#allocation8]
    $region13: #{tpu_custom_call.1} parent=1 // pred_fallthru
      _
    // Predicated region
    $region14: #{tpu_custom_call.1} parent=1 // pred_check
      _
    $region15: #{tpu_custom_call.1} parent=1 // pred_check_branch
      %41 = sbr.rel (0) target = $region17
    $region16: #{tpu_custom_call.1} parent=1 // pred_region
      %42 = dma.done [#allocation5], 16
    $region17: #{tpu_custom_call.1} parent=1 // pred_fallthru
      _
    // Predicated region
    $region18: #{tpu_custom_call.1} parent=1 // pred_check
      _
    $region19: #{tpu_custom_call.1} parent=1 // pred_check_branch
      %44 = sbr.rel (0) target = $region21
    $region20: #{tpu_custom_call.1} parent=1 // pred_region
      %45 = dma.done [#allocation3], 128
    $region21: #{tpu_custom_call.1} parent=1 // pred_fallthru
      _
    // Predicated region
    $region22: #{tpu_custom_call.1} parent=1 // pred_check
      _
    $region23: #{tpu_custom_call.1} parent=1 // pred_check_branch
      %47 = sbr.rel (0) target = $region25
    $region24: #{tpu_custom_call.1} parent=1 // pred_region
      %48 = dma.done [#allocation8], 128
    $region25: #{tpu_custom_call.1} parent=1 // pred_fallthru
      _
    %49 = sfence
    %s50 = sld [smem:[#allocation2]]
    %s51 = sld [smem:[#allocation2 + $0x1]]
    %s52 = sld [smem:[#allocation2 + $0x2]]
    %v53 = vld [vmem:[#allocation6] sm:$0xff]
    %v54 = vstv %s50
    %v55 = vmul.f32 %v53, %v54
    %v56 = vld [vmem:[#allocation7] sm:$0xff]
    %v57 = vstv %s51
    %v58 = vmul.f32 %v56, %v57
    %v59 = vstv %s52
    %v60 = vadd.f32 %v58, %v59
    %v61 = vadd.f32 %v55, %v60
    %v62 = vmax.f32 %v61, 0.0
    %v63 = vand.u32 2147483647, %v61
    %v64 = vsub.f32 0.0, %v63
    %v65 = vmul.f32 %v64, 1.442695
    %v66 = vpow.pop %v65
    %v67 = vadd.f32 %v66, 1.0
    %v68 = vlog2.pop %v67
    %v69 = vmul.f32 %v68, 0.6931472
    %v70 = vmul.f32 -0.5, %v66
    %v71 = vadd.f32 %v70, 1.0
    %v72 = vmul.f32 %v71, %v66
    %v73 = vand.u32 2147483647, %v66
    %vm74 = vcmp.lt.f32.partialorder %v73, 0.0004427343
    %v75 = vsel %vm74, %v72, %v69
    %v76 = vadd.f32 %v62, %v75
    %77 = vst [vmem:[#allocation9] sm:$0xff] %v76
    // Predicated region
    $region26: #{tpu_custom_call.1} parent=1 // pred_check
      _
    $region27: #{tpu_custom_call.1} parent=1 // pred_check_branch
      %79 = sbr.rel (0) target = $region29
    $region28: #{tpu_custom_call.1} parent=1 // pred_region
      %s81 = ssub.s32 128, 128
      %82 = vsyncadd [#allocation4], %s81
      %s84 = sshll.u32 [#allocation9], 4
      %s85 = int_to_ptr.vmem [resolvable:$true] %s84
      %87 = dma.vmem_to_hbm [thread:$0]  %s85, 128, %s3, [#allocation4]
    $region29: #{tpu_custom_call.1} parent=1 // pred_fallthru
      _
    // Predicated region
    $region30: #{tpu_custom_call.1} parent=1 // pred_check
      _
    $region31: #{tpu_custom_call.1} parent=1 // pred_check_branch
      %89 = sbr.rel (0) target = $region33
    $region32: #{tpu_custom_call.1} parent=1 // pred_region
      %90 = dma.done [#allocation4], 128
    $region33: #{tpu_custom_call.1} parent=1 // pred_fallthru
      _
    %91 = vsyncpa [#allocation3], 1
    %92 = vsyncpa [#allocation8], 1
    %93 = vsyncpa [#allocation4], 1
    %94 = vsyncpa [#allocation5], 1

</llo_original>
